<compile_context>
chip_gen: v5e
topology: v5e:2x2
jax: 0.10.0
libtpu: 0.0.40
codegen_flags: <defaults>
</compile_context>

<pallas_src>
import numpy as np
import jax
import jax.numpy as jnp
from jax.experimental import pallas as pl
from jax.experimental.pallas import tpu as pltpu

_LANE = 128


def _raw_score_kernel(xcat_ref, ea_ref, w2f_ref, b2f_ref, out_ref):
    # gate = (w1 ⊙ W2^T) @ ea^T + w1 ⊙ b2   -> [2C, TE], f32 accumulation.
    # (w1 / b2 already folded into w2f / b2f in the wrapper; b1 cancels in the
    #  segment softmax and is omitted.)
    gate = jnp.dot(w2f_ref[...], ea_ref[...],
                   preferred_element_type=jnp.float32) + b2f_ref[...]
    # raw[e] = sum_j xcat[j, e] * gate[j, e]
    # bf16 stream is upcast to f32 before the VPU multiply (v5e: no bf16 VALU);
    # sublane (XLU) reduction gives a lane-dense [1, TE] store.
    contrib = xcat_ref[...].astype(jnp.float32) * gate          # [2C, TE]
    out_ref[...] = jnp.sum(contrib, axis=0, keepdims=True)      # [1, TE]


def _pick_tile_e(e_lanes, rows_in, rows_acc):
    """Largest lane tile (multiple of 128) whose VMEM footprint fits ~16 MiB.

    rows_in  : streamed bf16 rows per lane (2C + A)
    rows_acc : f32 temporary rows per lane inside the kernel (2C)
    Budget = double-buffered bf16 inputs + f32 output + ~3 live f32 temps,
    conservative enough for v7x's 64 MiB (32 MiB scoped default) per-TC VMEM.
    """
    budget = 16 * 1024 * 1024
    per_lane = 2 * (2 * rows_in + 4) + 4 * 3 * rows_acc
    tile = 8192
    while tile > _LANE and tile * per_lane > budget:
        tile //= 2
    tile = max(_LANE, min(tile, e_lanes))
    # Keep >=2 grid steps when possible so the "parallel" axis feeds both
    # TensorCores on v7x (megacore sharding).
    if e_lanes >= 2 * _LANE and e_lanes <= tile:
        tile = ((e_lanes // 2 + _LANE - 1) // _LANE) * _LANE
    return tile


def edge_raw_scores_pallas(x, edge_index, edge_attr, w2, b2, w1):
    """Raw (pre-softmax, bias-free) edge scores, shape [E]."""
    N, C = x.shape
    E = edge_index.shape[1]
    A = edge_attr.shape[1]
    if E == 0:                                   # guard: empty-edge graph
        return jnp.zeros((0,), jnp.float32)

    e_lanes = ((E + _LANE - 1) // _LANE) * _LANE
    tile_e = _pick_tile_e(e_lanes, rows_in=2 * C + A, rows_acc=2 * C)
    e_pad = ((e_lanes + tile_e - 1) // tile_e) * tile_e
    grid = (e_pad // tile_e,)

    # Gather/transpose/pad glue stays in XLA but on bf16-cast data: the heavy
    # per-edge streams written to HBM (and re-read by the kernel) cost half the
    # bytes.  Edge axis lands on the 128-wide lane dimension (lane-dense).
    x_t = x.astype(jnp.bfloat16).T                                    # [C, N]
    xcat_t = jnp.concatenate(
        [x_t[:, edge_index[0]], x_t[:, edge_index[1]]], axis=0)      # [2C, E]
    xcat_t = jnp.pad(xcat_t, ((0, 0), (0, e_pad - E)))               # bf16
    ea_t = jnp.pad(edge_attr.astype(jnp.bfloat16).T,
                   ((0, 0), (0, e_pad - E)))                          # [A, E_pad]

    # Fold lin() weight w1 and lin2 bias b2 into the gate parameters:
    #   raw = sum_j xcat[j] * (W2^T ea + b2)[j] * w1[j]
    #       = sum_j xcat[j] * ((w1⊙W2^T) ea + w1⊙b2)[j]
    w1_c = w1.reshape(-1, 1).astype(jnp.float32)                      # [2C, 1]
    w2f = (w2.T.astype(jnp.float32) * w1_c).astype(jnp.bfloat16)      # [2C, A]
    b2f = b2.reshape(-1, 1).astype(jnp.float32) * w1_c                # [2C, 1]

    cost = pl.CostEstimate(
        flops=2 * (2 * C) * A * e_pad + 2 * (2 * C) * e_pad,
        transcendentals=0,
        bytes_accessed=(2 * ((2 * C) + A) * e_pad + 4 * e_pad
                        + 2 * (2 * C) * A + 4 * (2 * C)),
    )

    raw = pl.pallas_call(
        _raw_score_kernel,
        out_shape=jax.ShapeDtypeStruct((1, e_pad), jnp.float32),
        grid=grid,
        in_specs=[
            pl.BlockSpec((2 * C, tile_e), lambda i: (0, i)),   # x_cat^T (bf16)
            pl.BlockSpec((A, tile_e), lambda i: (0, i)),       # edge_attr^T (bf16)
            pl.BlockSpec((2 * C, A), lambda i: (0, 0)),        # folded W2^T (resident)
            pl.BlockSpec((2 * C, 1), lambda i: (0, 0)),        # folded b2
        ],
        out_specs=pl.BlockSpec((1, tile_e), lambda i: (0, i)),
        compiler_params=pltpu.CompilerParams(
            dimension_semantics=("parallel",),
            vmem_limit_bytes=32 * 1024 * 1024),
        cost_estimate=cost,
    )(xcat_t, ea_t, w2f, b2f)
    return raw[0, :E]


def edge_scores(x, edge_index, edge_attr, params, add_to_edge_score=0.5):
    """Final per-edge scores of shape [E] (dropout p=0 / eval is identity)."""
    raw = edge_raw_scores_pallas(x, edge_index, edge_attr,
                                 params["w2"], params["b2"], params["w1"])
    num_nodes = x.shape[0]
    E = raw.shape[0]
    if E == 0:
        return raw + jnp.float32(add_to_edge_score)
    # Segment softmax over target node (edge_index[1]) — O(E), no one-hot.
    # Edges are sorted by target once so segment reductions can use
    # indices_are_sorted=True; results scatter back to the original order.
    # (b1 cancels here; the +1e-16 eps is unnecessary since each edge
    #  contributes exp(0) >= 1 to its own segment denominator.)
    # TODO(synk): a CSR-offset Pallas segment softmax (MoE group-offset style)
    # would remove the XLA scatter reductions for very large E.
    tgt = edge_index[1]
    order = jnp.argsort(tgt)
    tgt_s = tgt[order]
    raw_s = raw[order]
    seg_max = jax.ops.segment_max(raw_s, tgt_s, num_segments=num_nodes,
                                  indices_are_sorted=True)
    p = jnp.exp(raw_s - seg_max[tgt_s])
    seg_sum = jax.ops.segment_sum(p, tgt_s, num_segments=num_nodes,
                                  indices_are_sorted=True)
    sm_s = p / seg_sum[tgt_s]
    sm = jnp.zeros_like(sm_s).at[order].set(sm_s)
    return sm + jnp.float32(add_to_edge_score)


def merge_edges_host(x, edge_index, batch, edge_score, edge_attr):
    # Greedy sequential edge contraction + coalesce, host numpy (see TODO above).
    N = x.shape[0]
    nodes_remaining = set(range(N))
    cluster = np.empty(N, dtype=np.int64)
    order = np.argsort(-edge_score, kind="stable")
    i = 0
    new_edge_indices = []
    for e_idx in order.tolist():
        s = int(edge_index[0, e_idx])
        if s not in nodes_remaining:
            continue
        t = int(edge_index[1, e_idx])
        if t not in nodes_remaining:
            continue
        new_edge_indices.append(e_idx)
        cluster[s] = i
        nodes_remaining.remove(s)
        if s != t:
            cluster[t] = i
            nodes_remaining.remove(t)
        i += 1
    remaining = sorted(nodes_remaining)
    for n_idx in remaining:
        cluster[n_idx] = i
        i += 1
    # scatter_add of node features into clusters
    new_x = np.zeros((i, x.shape[1]), dtype=x.dtype)
    np.add.at(new_x, cluster, x)
    new_edge_score = edge_score[new_edge_indices]
    if len(remaining) > 0:
        new_edge_score = np.concatenate(
            [new_edge_score,
             np.ones(i - len(new_edge_indices), dtype=x.dtype)])
    new_x = new_x * new_edge_score[:, None]
    Nn = new_x.shape[0]
    # coalesce(cluster[edge_index]): sort + dedup edges
    ci = cluster[edge_index]
    flat = ci[0] * Nn + ci[1]
    uniq = np.unique(flat)
    new_edge_index = np.stack([uniq // Nn, uniq % Nn], axis=0).astype(
        edge_index.dtype)
    new_batch = np.empty(Nn, dtype=batch.dtype)
    new_batch[cluster] = batch
    sel = np.array(new_edge_indices, dtype=np.int64)
    new_edge_attr = edge_attr[sel] * edge_score[sel][:, None]
    return new_x, new_edge_index, new_batch, new_edge_attr


def edge_pooling_forward(x, edge_index, batch, edge_attr, params,
                         add_to_edge_score=0.5):
    scores = edge_scores(x, edge_index, edge_attr, params,
                         add_to_edge_score=add_to_edge_score)
    scores = jax.block_until_ready(scores)
    return merge_edges_host(np.asarray(x), np.asarray(edge_index),
                            np.asarray(batch), np.asarray(scores),
                            np.asarray(edge_attr))


if __name__ == "__main__":
    N, C, E, A = 8, 4, 16, 5   # nodes, in_channels, edges, edge_attr dim
    key = jax.random.PRNGKey(0)
    k = jax.random.split(key, 8)

    x = jax.random.normal(k[0], (N, C), dtype=jnp.float32)
    edge_index = jax.random.randint(k[1], (2, E), 0, N, dtype=jnp.int32)
    batch = jnp.array([0, 0, 0, 0, 1, 1, 1, 1], dtype=jnp.int32)
    edge_attr = jax.random.normal(k[2], (E, A), dtype=jnp.float32)

    # Deterministic parameter init mirroring nn.Linear default uniform bounds.
    # lin  = Linear(2C, 1)  -> w1 [2C, 1], b1 [1]  (b1 cancels in softmax)
    # lin2 = Linear(5, 2C)  -> w2 [5, 2C], b2 [2C]
    bnd1 = 1.0 / np.sqrt(2 * C)
    w1 = jax.random.uniform(k[3], (2 * C, 1), jnp.float32, -bnd1, bnd1)
    b1 = jax.random.uniform(k[4], (1,), jnp.float32, -bnd1, bnd1)
    bnd2 = 1.0 / np.sqrt(A)
    w2 = jax.random.uniform(k[5], (A, 2 * C), jnp.float32, -bnd2, bnd2)
    b2 = jax.random.uniform(k[6], (2 * C,), jnp.float32, -bnd2, bnd2)
    params = {"w1": w1, "b1": b1, "w2": w2, "b2": b2}

    # Sanity check: Pallas raw scores vs a pure-JAX reference built from the
    # same bf16-cast streams (tolerance covers bf16 weight-fold rounding).
    raw_pallas = jax.block_until_ready(
        edge_raw_scores_pallas(x, edge_index, edge_attr, w2, b2, w1))
    xb = x.astype(jnp.bfloat16).astype(jnp.float32)
    eab = edge_attr.astype(jnp.bfloat16).astype(jnp.float32)
    xcat_ref = jnp.concatenate([xb[edge_index[0]], xb[edge_index[1]]], axis=-1)
    raw_ref = ((xcat_ref * (eab @ w2 + b2)) @ w1).ravel()
    np.testing.assert_allclose(np.asarray(raw_pallas), np.asarray(raw_ref),
                               rtol=5e-2, atol=5e-2)

    new_x, new_edge_index, new_batch, new_edge_attr = edge_pooling_forward(
        x, edge_index, batch, edge_attr, params)

    assert new_x.ndim == 2 and new_x.shape[1] == C
    assert new_edge_index.shape[0] == 2
    assert new_batch.shape[0] == new_x.shape[0]
    assert np.all(np.isfinite(new_x))
    print("KERNEL_OK")
</pallas_src>

<mosaic_0001>
module attributes {stable_mosaic.version = 11 : i64} {
  func.func @_raw_score_kernel(%arg0: i32, %arg1: memref<8x128xbf16, #tpu.memory_space<vmem>>, %arg2: memref<5x128xbf16, #tpu.memory_space<vmem>>, %arg3: memref<8x5xbf16, #tpu.memory_space<vmem>>, %arg4: memref<8x1xf32, #tpu.memory_space<vmem>>, %arg5: memref<1x128xf32, #tpu.memory_space<vmem>>) attributes {dimension_semantics = [#tpu.dimension_semantics<parallel>], iteration_bounds = array<i64: 1>, scalar_prefetch = 0 : i64, scratch_operands = 0 : i64, tpu.core_type = #tpu.core_type<tc>, window_params = [{transform_indices = @transform_0, window_bounds = array<i64: 8, 128>}, {transform_indices = @transform_1, window_bounds = array<i64: 5, 128>}, {pipeline_mode = #tpu.pipeline_mode<synchronous>, transform_indices = @transform_2, window_bounds = array<i64: 8, 5>}, {pipeline_mode = #tpu.pipeline_mode<synchronous>, transform_indices = @transform_3, window_bounds = array<i64: 8, 1>}, {transform_indices = @transform_4, window_bounds = array<i64: 1, 128>}]} {
    %c0 = arith.constant 0 : index
    %c0_0 = arith.constant 0 : index
    %0 = vector.load %arg3[%c0, %c0_0] : memref<8x5xbf16, #tpu.memory_space<vmem>>, vector<8x5xbf16>
    %c0_1 = arith.constant 0 : index
    %c0_2 = arith.constant 0 : index
    %1 = vector.load %arg2[%c0_1, %c0_2] : memref<5x128xbf16, #tpu.memory_space<vmem>>, vector<5x128xbf16>
    %cst = arith.constant dense<0.000000e+00> : vector<8x128xf32>
    %2 = tpu.matmul %0, %1, %cst {dimension_numbers = #tpu.dot_dimension_numbers<[1], [0], [0], [1], [0, 0, 1, 1], [], []>} : vector<8x5xbf16>, vector<5x128xbf16>, vector<8x128xf32> -> vector<8x128xf32>
    %c0_3 = arith.constant 0 : index
    %c0_4 = arith.constant 0 : index
    %3 = vector.load %arg4[%c0_3, %c0_4] : memref<8x1xf32, #tpu.memory_space<vmem>>, vector<8x1xf32>
    %4 = vector.broadcast %3 : vector<8x1xf32> to vector<8x128xf32>
    %5 = arith.addf %2, %4 : vector<8x128xf32>
    %c0_5 = arith.constant 0 : index
    %c0_6 = arith.constant 0 : index
    %6 = vector.load %arg1[%c0_5, %c0_6] : memref<8x128xbf16, #tpu.memory_space<vmem>>, vector<8x128xbf16>
    %7 = arith.extf %6 : vector<8x128xbf16> to vector<8x128xf32>
    %8 = arith.mulf %7, %5 : vector<8x128xf32>
    %cst_7 = arith.constant dense<0.000000e+00> : vector<128xf32>
    %9 = vector.multi_reduction <add>, %8, %cst_7 [0] : vector<8x128xf32> to vector<128xf32>
    %10 = vector.shape_cast %9 : vector<128xf32> to vector<1x128xf32>
    %c0_8 = arith.constant 0 : index
    %c0_9 = arith.constant 0 : index
    %11 = vector.load %arg5[%c0_8, %c0_9] : memref<1x128xf32, #tpu.memory_space<vmem>>, vector<1x128xf32>
    tpu.vector_store %arg5[%c0_8, %c0_9], %10 {strides = array<i32>} : memref<1x128xf32, #tpu.memory_space<vmem>>, vector<1x128xf32>,
    return
  }
  func.func @transform_0(%arg0: i32) -> (i32, i32) {
    %c0_i32 = arith.constant 0 : i32
    %c0_i32_0 = arith.constant 0 : i32
    return %c0_i32, %arg0 : i32, i32
  }
  func.func @transform_1(%arg0: i32) -> (i32, i32) {
    %c0_i32 = arith.constant 0 : i32
    %c0_i32_0 = arith.constant 0 : i32
    return %c0_i32, %arg0 : i32, i32
  }
  func.func @transform_2(%arg0: i32) -> (i32, i32) {
    %c0_i32 = arith.constant 0 : i32
    %c0_i32_0 = arith.constant 0 : i32
    %c0_i32_1 = arith.constant 0 : i32
    return %c0_i32, %c0_i32_0 : i32, i32
  }
  func.func @transform_3(%arg0: i32) -> (i32, i32) {
    %c0_i32 = arith.constant 0 : i32
    %c0_i32_0 = arith.constant 0 : i32
    %c0_i32_1 = arith.constant 0 : i32
    return %c0_i32, %c0_i32_0 : i32, i32
  }
  func.func @transform_4(%arg0: i32) -> (i32, i32) {
    %c0_i32 = arith.constant 0 : i32
    %c0_i32_0 = arith.constant 0 : i32
    return %c0_i32, %arg0 : i32, i32
  }
}

</mosaic_0001>

<llo_original>
// kernel: tpu_custom_call.1
$region0: #{tpu_custom_call.1}
  #allocation0 [shape = 'u32[]', space=smem, size = 0x4, offset = 0x4, fixed_abs, tag = 'smem constant byte address 0x4 - core index']
  #allocation1 [shape = 'u32[72,128]{1,0:T(1,128)}', space=vmem, size = 0x9000, scoped, tag = 'internal scratch']
  %s0 = inlined_call_operand.vmem [shape: bf16[8,128], index: 0, kind: input, shape index: {}]
  %s1 = inlined_call_operand.vmem [shape: bf16[5,128], index: 1, kind: input, shape index: {}]
  %s2 = inlined_call_operand.hbm [shape: bf16[8,5], index: 2, kind: input, shape index: {}]
  %s3 = inlined_call_operand.vmem [shape: f32[8,1], index: 3, kind: input, shape index: {}]
  %s4 = inlined_call_operand.hbm [shape: f32[1,128], index: 4, kind: output, shape index: {}]
  %s5 = sld [smem:[#allocation0]]
  $region30: #{tpu_custom_call.1} parent=0
    _
  %s7 = ssub.s32 1, %s5
  %s8 = scalar_select 0, %s7, %s5
  $region1: #{tpu_custom_call.1} parent=0
    #allocation2 [shape = 'u8[2048]{0}', space=vmem, size = 0x800, scoped, tag = 'input window, operand 2, single buffered']
    #allocation3 [shape = 's32[1]{0}', space=sflag, size = 0x4, scoped, tag = 'scoped memory for tpu_custom_call.1']
    #allocation4 [shape = 's32[1]{0}', space=sflag, size = 0x4, scoped, tag = 'scoped memory for tpu_custom_call.1']
    #allocation5 [shape = 'u8[512]{0}', space=vmem, size = 0x400, scoped, tag = 'output window, operand 0, single buffered']
    %9 = vsyncpa [#allocation3], 0
    %10 = vsyncpa [#allocation4], 0
    // Predicated region
    $region2: #{tpu_custom_call.1} parent=1 // pred_check
      _
    $region3: #{tpu_custom_call.1} parent=1 // pred_check_branch
      %12 = sbr.rel (0) target = $region5
    $region4: #{tpu_custom_call.1} parent=1 // pred_region
      _
    $region5: #{tpu_custom_call.1} parent=1 // pred_fallthru
      _
    // Predicated region
    $region6: #{tpu_custom_call.1} parent=1 // pred_check
      _
    $region7: #{tpu_custom_call.1} parent=1 // pred_check_branch
      %14 = sbr.rel (0) target = $region9
    $region8: #{tpu_custom_call.1} parent=1 // pred_region
      _
    $region9: #{tpu_custom_call.1} parent=1 // pred_fallthru
      _
    // Predicated region
    $region10: #{tpu_custom_call.1} parent=1 // pred_check
      _
    $region11: #{tpu_custom_call.1} parent=1 // pred_check_branch
      %16 = sbr.rel (0) target = $region13
    $region12: #{tpu_custom_call.1} parent=1 // pred_region
      %18 = vsyncadd [#allocation3], 0
      %s20 = sshll.u32 %s2, 4
      %s21 = int_to_ptr.hbm [resolvable:$true] %s20
      %s22 = sshll.u32 [#allocation2], 4
      %s23 = int_to_ptr.vmem [resolvable:$true] %s22
      %25 = dma.hbm_to_vmem [thread:$0]  %s21, 64, %s23, [#allocation3]
    $region13: #{tpu_custom_call.1} parent=1 // pred_fallthru
      _
    // Predicated region
    $region14: #{tpu_custom_call.1} parent=1 // pred_check
      _
    $region15: #{tpu_custom_call.1} parent=1 // pred_check_branch
      %27 = sbr.rel (0) target = $region17
    $region16: #{tpu_custom_call.1} parent=1 // pred_region
      _
    $region17: #{tpu_custom_call.1} parent=1 // pred_fallthru
      _
    // Predicated region
    $region18: #{tpu_custom_call.1} parent=1 // pred_check
      _
    $region19: #{tpu_custom_call.1} parent=1 // pred_check_branch
      %29 = sbr.rel (0) target = $region21
    $region20: #{tpu_custom_call.1} parent=1 // pred_region
      %31 = dma.done [#allocation3], 64
    $region21: #{tpu_custom_call.1} parent=1 // pred_fallthru
      _
    %v33 = vld [vmem:[#allocation2] sm:$0xf]
    %v34 = vld [vmem:[%s1] sm:$0x7]
    %v35 = vld [vmem:[%s3] sm:$0xff]
    %37 = vset.pattern.permute.xlu0 0
    %38 = vperm.xlu0 %37, %v35
    %v39 = vpop.permute.xlu0 %38
    %vm41 = vcmask 39936
    %v43 = vsel %vm41, %v33, 0
    %vm45 = vcmask 1041408
    %vm46 = vcmask 1042432
    %v47 = vsel %vm45, 4294967295, 65535
    %v48 = vsel %vm46, %v47, 0
    %v50 = vand.u32 %v34, %v48
    %52 = vmatpush.bf16.msra.mxu0 0
    %53 = vmatpush.bf16.msra.mxu0 0
    %54 = vmatpush.bf16.msra.mxu0 0
    %55 = vmatpush.bf16.msra.mxu0 0
    %56 = vmatpush.bf16.msra.mxu0 0
    %57 = vmatpush.bf16.msra.mxu0 0
    %58 = vmatpush.bf16.msra.mxu0 0
    %59 = vmatpush.bf16.msra.mxu0 %v50
    %60 = vmatmul.bf16.gmra.mxu0 %v43
    %v61 = vpop.f32.mrf.mxu0
    %v62 = vadd.f32 %v39, %v61
    %v63 = vpop.f32.mrf.mxu0
    %64 = vdwg.mxu0
    %v65 = vld [vmem:[%s0] sm:$0xf]
    %v66 = vunpack.c.l.bf16 %v65
    %v67 = vmul.f32 %v66, %v62
    %v68 = vrot.slane %v67, 4
    %v69 = vadd.f32 %v67, %v68
    %v70 = vrot.slane %v69, 2
    %v71 = vadd.f32 %v69, %v70
    %v72 = vrot.slane %v71, 1
    %v73 = vadd.f32 %v71, %v72
    %74 = vst [vmem:[#allocation5] sm:$0x1] %v73
    // Predicated region
    $region22: #{tpu_custom_call.1} parent=1 // pred_check
      _
    $region23: #{tpu_custom_call.1} parent=1 // pred_check_branch
      %76 = sbr.rel (0) target = $region25
    $region24: #{tpu_custom_call.1} parent=1 // pred_region
      %78 = vsyncadd [#allocation4], 0
      %s80 = sshll.u32 [#allocation5], 4
      %s81 = int_to_ptr.vmem [resolvable:$true] %s80
      %s82 = sshll.u32 %s4, 4
      %s83 = int_to_ptr.hbm [resolvable:$true] %s82
      %85 = dma.vmem_to_hbm [thread:$0]  %s81, 16, %s83, [#allocation4]
    $region25: #{tpu_custom_call.1} parent=1 // pred_fallthru
      _
    // Predicated region
    $region26: #{tpu_custom_call.1} parent=1 // pred_check
      _
    $region27: #{tpu_custom_call.1} parent=1 // pred_check_branch
      %87 = sbr.rel (0) target = $region29
    $region28: #{tpu_custom_call.1} parent=1 // pred_region
      %89 = dma.done [#allocation4], 16
    $region29: #{tpu_custom_call.1} parent=1 // pred_fallthru
      _
    %90 = vsyncpa [#allocation3], 1
    %91 = vsyncpa [#allocation4], 1

</llo_original>
